<compile_context>
chip_gen: v6e
topology: v6e:2x2x1
jax: 0.10.0
libtpu: 0.0.40
codegen_flags: <defaults>
</compile_context>

<pallas_src>
import functools

import jax
import jax.numpy as jnp
from jax.experimental import pallas as pl
from jax.experimental.pallas import tpu as pltpu

OUT_PAD = 128     # lane-dense padded width of the fused output slab
TB_CAP = 512      # max batch-tile rows (review: 128 -> 512 to amortize per-step overhead)


def _round_up(x, m):
    return ((x + m - 1) // m) * m


# ------------------------------ fused kernel --------------------------------

def _fused_kernel(x_ref, w1_ref, ws_ref, vec_ref, out_ref):
    """Packed 4-network trunk (block-diagonal) + all heads + per-column clamp.

    ws_ref  : [4*HP, C]   rows [k*HP:(k+1)*HP] hold w2/w3/w4/wh (k=0..3)
    vec_ref : [8, C]      rows 0..3 = b1..b4, 4 = bh, 5 = clip_lo, 6 = clip_hi
    """
    hp = ws_ref.shape[0] // 4          # packed hidden width (4 * hidden_dim)
    op = out_ref.shape[1]              # padded output width (128)

    # layer 1: [tb, S] @ [S, hp]
    h = jnp.dot(x_ref[...], w1_ref[...], preferred_element_type=jnp.float32)
    h = jnp.maximum(h + vec_ref[0:1, 0:hp], 0.0)          # ReLU (dropout == identity)

    # layers 2-4: block-diagonal [hp, hp] blocks, static slices of the slab
    for k in range(3):
        w = ws_ref[k * hp:(k + 1) * hp, 0:hp]
        h = jnp.dot(h, w, preferred_element_type=jnp.float32)
        h = jnp.maximum(h + vec_ref[k + 1:k + 2, 0:hp], 0.0)

    # all six heads at once: [tb, hp] @ [hp, op]
    o = jnp.dot(h, ws_ref[3 * hp:4 * hp, 0:op], preferred_element_type=jnp.float32)
    o = o + vec_ref[4:5, 0:op]
    out_ref[...] = jnp.clip(o, vec_ref[5:6, 0:op], vec_ref[6:7, 0:op])


# ------------------------------ wrapper --------------------------------------

def hybrid_actor_critic_forward(state, packed, layout):
    """Mirrors HybridActorCritic.forward via one fused pallas_call.

    `layout` is a static tuple of (name, col_lo, col_hi) describing where each
    head lives inside the 128-wide output slab.
    """
    B, S = state.shape
    w1, ws, vec = packed["w1"], packed["ws"], packed["vec"]
    hp = ws.shape[0] // 4
    o_pad = OUT_PAD

    # --- batch tiling (sublane-aligned; >=2 grid steps when big enough so the
    #     "parallel" axis shards across both TensorCores on v7x) --------------
    b8 = _round_up(B, 8)
    if b8 >= 16:
        tb = min(TB_CAP, _round_up(max(b8 // 2, 8), 8))
    else:
        tb = b8
    bp = _round_up(b8, tb)
    if bp != B:
        state = jnp.pad(state, ((0, bp - B), (0, 0)))
    grid = (bp // tb,)

    weight_args = [w1, ws, vec]
    flops = 2 * bp * (S * hp + 3 * hp * hp + hp * o_pad)
    bytes_accessed = 4 * (bp * S + bp * o_pad + sum(int(a.size) for a in weight_args))

    out = pl.pallas_call(
        _fused_kernel,
        out_shape=jax.ShapeDtypeStruct((bp, o_pad), jnp.float32),
        grid=grid,
        in_specs=[
            pl.BlockSpec((tb, S), lambda i: (i, 0)),          # state tile
            pl.BlockSpec(w1.shape, lambda i: (0, 0)),         # layer-1 weights
            pl.BlockSpec(ws.shape, lambda i: (0, 0)),         # stacked w2/w3/w4/wh
            pl.BlockSpec(vec.shape, lambda i: (0, 0)),        # biases + clip vectors
        ],
        out_specs=pl.BlockSpec((tb, o_pad), lambda i: (i, 0)),
        compiler_params=pltpu.CompilerParams(
            dimension_semantics=("parallel",)),
        cost_estimate=pl.CostEstimate(flops=flops, transcendentals=0,
                                      bytes_accessed=bytes_accessed),
    )(state, *weight_args)

    out = out[:B]
    return {name: out[:, lo_c:hi_c] for name, lo_c, hi_c in layout}


# --------------------------- parameter init -----------------------------------

def init_linear(key, in_dim, out_dim, fill=None):
    if fill is not None:  # log_std_head.weight/bias .fill_(-0.5) in the reference
        return (jnp.full((in_dim, out_dim), fill, jnp.float32),
                jnp.full((1, out_dim), fill, jnp.float32))
    kw, kb = jax.random.split(key)
    bound = 1.0 / (in_dim ** 0.5)  # PyTorch default nn.Linear init range
    w = jax.random.uniform(kw, (in_dim, out_dim), jnp.float32, -bound, bound)
    b = jax.random.uniform(kb, (1, out_dim), jnp.float32, -bound, bound)
    return w, b


def init_trunk(key, state_dim, hidden_dim):
    keys = jax.random.split(key, 4)
    p = {}
    dims = [(state_dim, hidden_dim)] + [(hidden_dim, hidden_dim)] * 3
    for i, (k, (din, dout)) in enumerate(zip(keys, dims), start=1):
        p[f"w{i}"], p[f"b{i}"] = init_linear(k, din, dout)
    return p


def init_params(key, state_dim, discrete_action_dim, hidden_dim):
    k_d, k_t, k_p, k_c = jax.random.split(key, 4)

    kd_t, kd_h = jax.random.split(k_d)
    discrete = init_trunk(kd_t, state_dim, hidden_dim)
    discrete["wh"], discrete["bh"] = init_linear(kd_h, hidden_dim, discrete_action_dim)

    kt_t, kt_m = jax.random.split(k_t)
    task = init_trunk(kt_t, state_dim, hidden_dim)
    task["wm"], task["bm"] = init_linear(kt_m, hidden_dim, 3)
    task["ws"], task["bs"] = init_linear(kt_m, hidden_dim, 3, fill=-0.5)

    kp_t, kp_m = jax.random.split(k_p)
    power = init_trunk(kp_t, state_dim, hidden_dim)
    power["wm"], power["bm"] = init_linear(kp_m, hidden_dim, 3)
    power["ws"], power["bs"] = init_linear(kp_m, hidden_dim, 3, fill=-0.5)

    kc_t, kc_h = jax.random.split(k_c)
    critic = init_trunk(kc_t, state_dim, hidden_dim)
    critic["wh"], critic["bh"] = init_linear(kc_h, hidden_dim, 1)

    return {"discrete": discrete, "task": task, "power": power, "critic": critic}


# ----------------------- lane-dense parameter packing -------------------------

def _block_diag(mats):
    h = mats[0].shape[0]
    n = len(mats)
    out = jnp.zeros((n * h, n * h), jnp.float32)
    for i, m in enumerate(mats):
        out = out.at[i * h:(i + 1) * h, i * h:(i + 1) * h].set(m)
    return out


def pack_params(params, hidden_dim, out_pad=OUT_PAD):
    """Pack the 4 independent networks into one block-diagonal network.

    Returns:
      packed: {"w1": [S, HP], "ws": [4*HP, C], "vec": [8, C]}
      layout: tuple of (head_name, col_lo, col_hi) into the output slab.
    Runs ONCE at init time -- keep out of the per-call hot path.
    """
    nets = ("discrete", "task", "power", "critic")
    h = hidden_dim
    hp = 4 * h
    assert hp % 8 == 0, "packed hidden width must be sublane-aligned"
    cols = max(hp, out_pad)

    w1 = jnp.concatenate([params[n]["w1"] for n in nets], axis=1)       # [S, hp]

    # (trunk block index, weight, bias, clip_lo, clip_hi, output name)
    heads = [
        (0, params["discrete"]["wh"], params["discrete"]["bh"], -10.0, 10.0, "discrete_logits"),
        (1, params["task"]["wm"],     params["task"]["bm"],     -10.0, 10.0, "task_mean"),
        (1, params["task"]["ws"],     params["task"]["bs"],     -20.0,  2.0, "task_log_std"),
        (2, params["power"]["wm"],    params["power"]["bm"],    -10.0, 10.0, "power_mean"),
        (2, params["power"]["ws"],    params["power"]["bs"],    -20.0,  2.0, "power_log_std"),
        (3, params["critic"]["wh"],   params["critic"]["bh"],  -100.0, 100.0, "value"),
    ]
    total = sum(w.shape[1] for _, w, *_ in heads)
    assert total <= out_pad, "increase OUT_PAD"

    # ---- single stacked weight slab: rows [k*hp:(k+1)*hp] = w2, w3, w4, wh ----
    ws = jnp.zeros((4 * hp, cols), jnp.float32)
    for k, li in enumerate((2, 3, 4)):
        blk = _block_diag([params[n][f"w{li}"] for n in nets])          # [hp, hp]
        ws = ws.at[k * hp:(k + 1) * hp, 0:hp].set(blk)

    # ---- single (8, cols) vector slab: b1..b4, bh, clip_lo, clip_hi ----------
    vec = jnp.zeros((8, cols), jnp.float32)
    vec = vec.at[0, 0:hp].set(jnp.concatenate([params[n]["b1"] for n in nets], axis=1)[0])
    for k, li in enumerate((2, 3, 4)):
        vec = vec.at[k + 1, 0:hp].set(
            jnp.concatenate([params[n][f"b{li}"] for n in nets], axis=1)[0])

    layout = []
    col = 0
    for blk, w, b, c_lo, c_hi, name in heads:
        d = w.shape[1]
        ws = ws.at[3 * hp + blk * h:3 * hp + (blk + 1) * h, col:col + d].set(w)
        vec = vec.at[4, col:col + d].set(b[0])
        vec = vec.at[5, col:col + d].set(c_lo)
        vec = vec.at[6, col:col + d].set(c_hi)
        layout.append((name, col, col + d))
        col += d

    packed = {"w1": w1, "ws": ws, "vec": vec}
    return packed, tuple(layout)


# ------------------------------- reference ------------------------------------

def _ref_trunk(x, p):
    h = x
    for i in (1, 2, 3, 4):
        h = jnp.maximum(h @ p[f"w{i}"] + p[f"b{i}"], 0.0)
    return h


def reference_forward(state, params):
    out = {}
    h = _ref_trunk(state, params["discrete"])
    out["discrete_logits"] = jnp.clip(h @ params["discrete"]["wh"] + params["discrete"]["bh"], -10, 10)
    for name in ("task", "power"):
        h = _ref_trunk(state, params[name])
        out[f"{name}_mean"] = jnp.clip(h @ params[name]["wm"] + params[name]["bm"], -10, 10)
        out[f"{name}_log_std"] = jnp.clip(h @ params[name]["ws"] + params[name]["bs"], -20, 2)
    h = _ref_trunk(state, params["critic"])
    out["value"] = jnp.clip(h @ params["critic"]["wh"] + params["critic"]["bh"], -100, 100)
    return out


# --------------------------------- main ---------------------------------------

if __name__ == "__main__":
    B, STATE_DIM, HIDDEN_DIM, DISCRETE_ACTION_DIM = 4, 16, 32, 8

    key = jax.random.PRNGKey(0)
    k_state, k_params = jax.random.split(key)
    state = jax.random.normal(k_state, (B, STATE_DIM), jnp.float32)
    params = init_params(k_params, STATE_DIM, DISCRETE_ACTION_DIM, HIDDEN_DIM)

    # Packing runs once, outside the hot path; materialize before use.
    packed, layout = pack_params(params, HIDDEN_DIM)
    packed = jax.tree_util.tree_map(jax.block_until_ready, packed)

    fwd = jax.jit(hybrid_actor_critic_forward, static_argnames=("layout",))
    out = fwd(state, packed, layout=layout)
    out = jax.tree_util.tree_map(jax.block_until_ready, out)

    ref = reference_forward(state, params)
    for name in ("discrete_logits", "task_mean", "task_log_std",
                 "power_mean", "power_log_std", "value"):
        assert out[name].shape == ref[name].shape, name
        assert jnp.allclose(out[name], ref[name], atol=1e-5, rtol=1e-5), name

    print("KERNEL_OK")
</pallas_src>

<mosaic_0001>
module attributes {stable_mosaic.version = 11 : i64} {
  func.func @_fused_kernel(%arg0: i32, %arg1: memref<8x16xf32, #tpu.memory_space<vmem>>, %arg2: memref<16x128xf32, #tpu.memory_space<vmem>>, %arg3: memref<512x128xf32, #tpu.memory_space<vmem>>, %arg4: memref<8x128xf32, #tpu.memory_space<vmem>>, %arg5: memref<8x128xf32, #tpu.memory_space<vmem>>) attributes {dimension_semantics = [#tpu.dimension_semantics<parallel>], iteration_bounds = array<i64: 1>, scalar_prefetch = 0 : i64, scratch_operands = 0 : i64, tpu.core_type = #tpu.core_type<tc>, window_params = [{transform_indices = @transform_0, window_bounds = array<i64: 8, 16>}, {pipeline_mode = #tpu.pipeline_mode<synchronous>, transform_indices = @transform_1, window_bounds = array<i64: 16, 128>}, {pipeline_mode = #tpu.pipeline_mode<synchronous>, transform_indices = @transform_2, window_bounds = array<i64: 512, 128>}, {pipeline_mode = #tpu.pipeline_mode<synchronous>, transform_indices = @transform_3, window_bounds = array<i64: 8, 128>}, {transform_indices = @transform_4, window_bounds = array<i64: 8, 128>}]} {
    %c0 = arith.constant 0 : index
    %c0_0 = arith.constant 0 : index
    %0 = vector.load %arg1[%c0, %c0_0] : memref<8x16xf32, #tpu.memory_space<vmem>>, vector<8x16xf32>
    %c0_1 = arith.constant 0 : index
    %c0_2 = arith.constant 0 : index
    %1 = vector.load %arg2[%c0_1, %c0_2] : memref<16x128xf32, #tpu.memory_space<vmem>>, vector<16x128xf32>
    %cst = arith.constant dense<0.000000e+00> : vector<8x128xf32>
    %2 = tpu.matmul %0, %1, %cst {dimension_numbers = #tpu.dot_dimension_numbers<[1], [0], [0], [1], [0, 0, 1, 1], [], []>} : vector<8x16xf32>, vector<16x128xf32>, vector<8x128xf32> -> vector<8x128xf32>
    %c0_3 = arith.constant 0 : index
    %c0_4 = arith.constant 0 : index
    %3 = vector.load %arg4[%c0_3, %c0_4] : memref<8x128xf32, #tpu.memory_space<vmem>>, vector<1x128xf32>
    %4 = vector.broadcast %3 : vector<1x128xf32> to vector<8x128xf32>
    %5 = arith.addf %2, %4 : vector<8x128xf32>
    %cst_5 = arith.constant 0.000000e+00 : f32
    %6 = vector.broadcast %cst_5 : f32 to vector<8x128xf32>
    %7 = arith.maximumf %5, %6 : vector<8x128xf32>
    %c0_6 = arith.constant 0 : index
    %c0_7 = arith.constant 0 : index
    %8 = vector.load %arg3[%c0_6, %c0_7] : memref<512x128xf32, #tpu.memory_space<vmem>>, vector<128x128xf32>
    %cst_8 = arith.constant dense<0.000000e+00> : vector<8x128xf32>
    %9 = tpu.matmul %7, %8, %cst_8 {dimension_numbers = #tpu.dot_dimension_numbers<[1], [0], [0], [1], [0, 0, 1, 1], [], []>} : vector<8x128xf32>, vector<128x128xf32>, vector<8x128xf32> -> vector<8x128xf32>
    %c1 = arith.constant 1 : index
    %c0_9 = arith.constant 0 : index
    %10 = vector.load %arg4[%c1, %c0_9] : memref<8x128xf32, #tpu.memory_space<vmem>>, vector<1x128xf32>
    %11 = vector.broadcast %10 : vector<1x128xf32> to vector<8x128xf32>
    %12 = arith.addf %9, %11 : vector<8x128xf32>
    %cst_10 = arith.constant 0.000000e+00 : f32
    %13 = vector.broadcast %cst_10 : f32 to vector<8x128xf32>
    %14 = arith.maximumf %12, %13 : vector<8x128xf32>
    %c128 = arith.constant 128 : index
    %c0_11 = arith.constant 0 : index
    %15 = vector.load %arg3[%c128, %c0_11] : memref<512x128xf32, #tpu.memory_space<vmem>>, vector<128x128xf32>
    %cst_12 = arith.constant dense<0.000000e+00> : vector<8x128xf32>
    %16 = tpu.matmul %14, %15, %cst_12 {dimension_numbers = #tpu.dot_dimension_numbers<[1], [0], [0], [1], [0, 0, 1, 1], [], []>} : vector<8x128xf32>, vector<128x128xf32>, vector<8x128xf32> -> vector<8x128xf32>
    %c2 = arith.constant 2 : index
    %c0_13 = arith.constant 0 : index
    %17 = vector.load %arg4[%c2, %c0_13] : memref<8x128xf32, #tpu.memory_space<vmem>>, vector<1x128xf32>
    %18 = vector.broadcast %17 : vector<1x128xf32> to vector<8x128xf32>
    %19 = arith.addf %16, %18 : vector<8x128xf32>
    %cst_14 = arith.constant 0.000000e+00 : f32
    %20 = vector.broadcast %cst_14 : f32 to vector<8x128xf32>
    %21 = arith.maximumf %19, %20 : vector<8x128xf32>
    %c256 = arith.constant 256 : index
    %c0_15 = arith.constant 0 : index
    %22 = vector.load %arg3[%c256, %c0_15] : memref<512x128xf32, #tpu.memory_space<vmem>>, vector<128x128xf32>
    %cst_16 = arith.constant dense<0.000000e+00> : vector<8x128xf32>
    %23 = tpu.matmul %21, %22, %cst_16 {dimension_numbers = #tpu.dot_dimension_numbers<[1], [0], [0], [1], [0, 0, 1, 1], [], []>} : vector<8x128xf32>, vector<128x128xf32>, vector<8x128xf32> -> vector<8x128xf32>
    %c3 = arith.constant 3 : index
    %c0_17 = arith.constant 0 : index
    %24 = vector.load %arg4[%c3, %c0_17] : memref<8x128xf32, #tpu.memory_space<vmem>>, vector<1x128xf32>
    %25 = vector.broadcast %24 : vector<1x128xf32> to vector<8x128xf32>
    %26 = arith.addf %23, %25 : vector<8x128xf32>
    %cst_18 = arith.constant 0.000000e+00 : f32
    %27 = vector.broadcast %cst_18 : f32 to vector<8x128xf32>
    %28 = arith.maximumf %26, %27 : vector<8x128xf32>
    %c384 = arith.constant 384 : index
    %c0_19 = arith.constant 0 : index
    %29 = vector.load %arg3[%c384, %c0_19] : memref<512x128xf32, #tpu.memory_space<vmem>>, vector<128x128xf32>
    %cst_20 = arith.constant dense<0.000000e+00> : vector<8x128xf32>
    %30 = tpu.matmul %28, %29, %cst_20 {dimension_numbers = #tpu.dot_dimension_numbers<[1], [0], [0], [1], [0, 0, 1, 1], [], []>} : vector<8x128xf32>, vector<128x128xf32>, vector<8x128xf32> -> vector<8x128xf32>
    %c4 = arith.constant 4 : index
    %c0_21 = arith.constant 0 : index
    %31 = vector.load %arg4[%c4, %c0_21] : memref<8x128xf32, #tpu.memory_space<vmem>>, vector<1x128xf32>
    %32 = vector.broadcast %31 : vector<1x128xf32> to vector<8x128xf32>
    %33 = arith.addf %30, %32 : vector<8x128xf32>
    %c5 = arith.constant 5 : index
    %c0_22 = arith.constant 0 : index
    %34 = vector.load %arg4[%c5, %c0_22] : memref<8x128xf32, #tpu.memory_space<vmem>>, vector<1x128xf32>
    %c6 = arith.constant 6 : index
    %c0_23 = arith.constant 0 : index
    %35 = vector.load %arg4[%c6, %c0_23] : memref<8x128xf32, #tpu.memory_space<vmem>>, vector<1x128xf32>
    %36 = vector.broadcast %34 : vector<1x128xf32> to vector<8x128xf32>
    %37 = arith.maximumf %36, %33 : vector<8x128xf32>
    %38 = vector.broadcast %35 : vector<1x128xf32> to vector<8x128xf32>
    %39 = arith.minimumf %38, %37 : vector<8x128xf32>
    %c0_24 = arith.constant 0 : index
    %c0_25 = arith.constant 0 : index
    %40 = vector.load %arg5[%c0_24, %c0_25] : memref<8x128xf32, #tpu.memory_space<vmem>>, vector<8x128xf32>
    tpu.vector_store %arg5[%c0_24, %c0_25], %39 {strides = array<i32>} : memref<8x128xf32, #tpu.memory_space<vmem>>, vector<8x128xf32>,
    return
  }
  func.func @transform_0(%arg0: i32) -> (i32, i32) {
    %c0_i32 = arith.constant 0 : i32
    %c0_i32_0 = arith.constant 0 : i32
    return %arg0, %c0_i32 : i32, i32
  }
  func.func @transform_1(%arg0: i32) -> (i32, i32) {
    %c0_i32 = arith.constant 0 : i32
    %c0_i32_0 = arith.constant 0 : i32
    %c0_i32_1 = arith.constant 0 : i32
    return %c0_i32, %c0_i32_0 : i32, i32
  }
  func.func @transform_2(%arg0: i32) -> (i32, i32) {
    %c0_i32 = arith.constant 0 : i32
    %c0_i32_0 = arith.constant 0 : i32
    %c0_i32_1 = arith.constant 0 : i32
    return %c0_i32, %c0_i32_0 : i32, i32
  }
  func.func @transform_3(%arg0: i32) -> (i32, i32) {
    %c0_i32 = arith.constant 0 : i32
    %c0_i32_0 = arith.constant 0 : i32
    %c0_i32_1 = arith.constant 0 : i32
    return %c0_i32, %c0_i32_0 : i32, i32
  }
  func.func @transform_4(%arg0: i32) -> (i32, i32) {
    %c0_i32 = arith.constant 0 : i32
    %c0_i32_0 = arith.constant 0 : i32
    return %arg0, %c0_i32 : i32, i32
  }
}

</mosaic_0001>

<llo_original>
// kernel: hybrid_actor_critic_forward.1
$region0: #{hybrid_actor_critic_forward.1}
  #allocation0 [shape = 'u32[]', space=smem, size = 0x4, offset = 0x4, fixed_abs, tag = 'smem constant byte address 0x4 - core index']
  #allocation1 [shape = 'u32[144,128]{1,0:T(1,128)}', space=vmem, size = 0x12000, scoped, tag = 'internal scratch']
  %s0 = inlined_call_operand.vmem [shape: f32[8,16], index: 0, kind: input, shape index: {}]
  %s1 = inlined_call_operand.hbm [shape: f32[16,128], index: 1, kind: input, shape index: {}]
  %s2 = inlined_call_operand.hbm [shape: f32[512,128], index: 2, kind: input, shape index: {}]
  %s3 = inlined_call_operand.vmem [shape: f32[8,128], index: 3, kind: input, shape index: {}]
  %s4 = inlined_call_operand.vmem [shape: f32[8,128], index: 4, kind: output, shape index: {}]
  %s5 = sld [smem:[#allocation0]]
  $region34: #{hybrid_actor_critic_forward.1} parent=0
    _
  %s7 = ssub.s32 1, %s5
  %s8 = scalar_select 0, %s7, %s5
  $region1: #{hybrid_actor_critic_forward.1} parent=0
    #allocation2 [shape = 'u8[8192]{0}', space=vmem, size = 0x2000, scoped, tag = 'input window, operand 1, single buffered']
    #allocation3 [shape = 's32[1]{0}', space=sflag, size = 0x4, scoped, tag = 'scoped memory for hybrid_actor_critic_forward.1']
    #allocation4 [shape = 'u8[262144]{0}', space=vmem, size = 0x40000, scoped, tag = 'input window, operand 2, single buffered']
    #allocation5 [shape = 's32[1]{0}', space=sflag, size = 0x4, scoped, tag = 'scoped memory for hybrid_actor_critic_forward.1']
    %9 = vsyncpa [#allocation3], 0
    %10 = vsyncpa [#allocation5], 0
    // Predicated region
    $region2: #{hybrid_actor_critic_forward.1} parent=1 // pred_check
      _
    $region3: #{hybrid_actor_critic_forward.1} parent=1 // pred_check_branch
      %12 = sbr.rel (0) target = $region5
    $region4: #{hybrid_actor_critic_forward.1} parent=1 // pred_region
      _
    $region5: #{hybrid_actor_critic_forward.1} parent=1 // pred_fallthru
      _
    // Predicated region
    $region6: #{hybrid_actor_critic_forward.1} parent=1 // pred_check
      _
    $region7: #{hybrid_actor_critic_forward.1} parent=1 // pred_check_branch
      %14 = sbr.rel (0) target = $region9
    $region8: #{hybrid_actor_critic_forward.1} parent=1 // pred_region
      %s16 = ssub.s32 256, 256
      %17 = vsyncadd [#allocation3], %s16
      %s18 = sshll.u32 [#allocation2], 4
      %s19 = int_to_ptr.vmem [resolvable:$true] %s18
      %24 = dma.hbm_to_vmem [thread:$0]  %s1, 256, %s19, [#allocation3], 128, 128, 8
    $region9: #{hybrid_actor_critic_forward.1} parent=1 // pred_fallthru
      _
    // Predicated region
    $region10: #{hybrid_actor_critic_forward.1} parent=1 // pred_check
      _
    $region11: #{hybrid_actor_critic_forward.1} parent=1 // pred_check_branch
      %26 = sbr.rel (0) target = $region13
    $region12: #{hybrid_actor_critic_forward.1} parent=1 // pred_region
      %s28 = ssub.s32 8192, 8192
      %29 = vsyncadd [#allocation5], %s28
      %s30 = sshll.u32 [#allocation4], 4
      %s31 = int_to_ptr.vmem [resolvable:$true] %s30
      %36 = dma.hbm_to_vmem [thread:$0]  %s2, 8192, %s31, [#allocation5], 128, 128, 8
    $region13: #{hybrid_actor_critic_forward.1} parent=1 // pred_fallthru
      _
    // Predicated region
    $region14: #{hybrid_actor_critic_forward.1} parent=1 // pred_check
      _
    $region15: #{hybrid_actor_critic_forward.1} parent=1 // pred_check_branch
      %38 = sbr.rel (0) target = $region17
    $region16: #{hybrid_actor_critic_forward.1} parent=1 // pred_region
      _
    $region17: #{hybrid_actor_critic_forward.1} parent=1 // pred_fallthru
      _
    // Predicated region
    $region18: #{hybrid_actor_critic_forward.1} parent=1 // pred_check
      _
    $region19: #{hybrid_actor_critic_forward.1} parent=1 // pred_check_branch
      %40 = sbr.rel (0) target = $region21
    $region20: #{hybrid_actor_critic_forward.1} parent=1 // pred_region
      %41 = dma.done [#allocation3], 256
    $region21: #{hybrid_actor_critic_forward.1} parent=1 // pred_fallthru
      _
    // Predicated region
    $region22: #{hybrid_actor_critic_forward.1} parent=1 // pred_check
      _
    $region23: #{hybrid_actor_critic_forward.1} parent=1 // pred_check_branch
      %43 = sbr.rel (0) target = $region25
    $region24: #{hybrid_actor_critic_forward.1} parent=1 // pred_region
      %44 = dma.done [#allocation5], 8192
    $region25: #{hybrid_actor_critic_forward.1} parent=1 // pred_fallthru
      _
    %v45 = vld [vmem:[%s0] sm:$0xff]
    %v46 = vld [vmem:[#allocation2] sm:$0xff]
    %v47 = vld [vmem:[#allocation2 + $0x8] sm:$0xff]
    %v48 = vld [vmem:[%s3] sm:$0x1]
    %v49 = vlaneseq
    %v50 = vshrl.u32 %v49, 7
    %v51 = vsub.s32 0, %v50
    %v52 = vrot.slane %v48, %v51
    %vm53 = vcmask 130048
    %v55 = vsel %vm53, %v45, 0
    %57 = vmatprep.subr.mxu0 0.0
    %58 = vmatpush1.msra.mxu0 0.0
    %59 = vmatprep.subr.mxu0 0.0
    %60 = vmatpush1.msra.mxu0 0.0
    %61 = vmatprep.subr.mxu0 0.0
    %62 = vmatpush1.msra.mxu0 0.0
    %63 = vmatprep.subr.mxu0 0.0
    %64 = vmatpush1.msra.mxu0 0.0
    %65 = vmatprep.subr.mxu0 0.0
    %66 = vmatpush1.msra.mxu0 0.0
    %67 = vmatprep.subr.mxu0 0.0
    %68 = vmatpush1.msra.mxu0 0.0
    %69 = vmatprep.subr.mxu0 0.0
    %70 = vmatpush1.msra.mxu0 0.0
    %71 = vmatprep.subr.mxu0 0.0
    %72 = vmatpush1.msra.mxu0 0.0
    %73 = vmatprep.subr.mxu0 0.0
    %74 = vmatpush1.msra.mxu0 0.0
    %75 = vmatprep.subr.mxu0 0.0
    %76 = vmatpush1.msra.mxu0 0.0
    %77 = vmatprep.subr.mxu0 0.0
    %78 = vmatpush1.msra.mxu0 0.0
    %79 = vmatprep.subr.mxu0 0.0
    %80 = vmatpush1.msra.mxu0 0.0
    %81 = vmatprep.subr.mxu0 0.0
    %82 = vmatpush1.msra.mxu0 0.0
    %83 = vmatprep.subr.mxu0 0.0
    %84 = vmatpush1.msra.mxu0 0.0
    %85 = vmatprep.subr.mxu0 0.0
    %86 = vmatpush1.msra.mxu0 %v47
    %87 = vmatprep.subr.mxu0 0.0
    %88 = vmatpush1.msra.mxu0 %v46
    %89 = vmatprep.subr.mxu0 0.0
    %90 = vmatpush2.msra.mxu0 0.0
    %91 = vmatprep.subr.mxu0 0.0
    %92 = vmatpush2.msra.mxu0 0.0
    %93 = vmatprep.subr.mxu0 0.0
    %94 = vmatpush2.msra.mxu0 0.0
    %95 = vmatprep.subr.mxu0 0.0
    %96 = vmatpush2.msra.mxu0 0.0
    %97 = vmatprep.subr.mxu0 0.0
    %98 = vmatpush2.msra.mxu0 0.0
    %99 = vmatprep.subr.mxu0 0.0
    %100 = vmatpush2.msra.mxu0 0.0
    %101 = vmatprep.subr.mxu0 0.0
    %102 = vmatpush2.msra.mxu0 0.0
    %103 = vmatprep.subr.mxu0 0.0
    %104 = vmatpush2.msra.mxu0 0.0
    %105 = vmatprep.subr.mxu0 0.0
    %106 = vmatpush2.msra.mxu0 0.0
    %107 = vmatprep.subr.mxu0 0.0
    %108 = vmatpush2.msra.mxu0 0.0
    %109 = vmatprep.subr.mxu0 0.0
    %110 = vmatpush2.msra.mxu0 0.0
    %111 = vmatprep.subr.mxu0 0.0
    %112 = vmatpush2.msra.mxu0 0.0
    %113 = vmatprep.subr.mxu0 0.0
    %114 = vmatpush2.msra.mxu0 0.0
    %115 = vmatprep.subr.mxu0 0.0
    %116 = vmatpush2.msra.mxu0 0.0
    %117 = vmatprep.subr.mxu0 0.0
    %118 = vmatpush2.msra.mxu0 0.0
    %119 = vmatprep.subr.mxu0 0.0
    %120 = vmatpush2.msra.mxu0 0.0
    %121 = vmatprep.mubr.f32.mxu0 0.0
    %122 = vmatmul.mubr.f32.gmra.mxu0 %v55
    %v123 = vpop.f32.mrf.mxu0
    %v124 = vadd.f32 %v52, %v123
    %v125 = vpop.f32.mrf.mxu0
    %126 = vdwg.mxu0
    %v127 = vmax.f32 %v124, 0.0
    %v128 = vld [vmem:[#allocation4] sm:$0xff]
    %v129 = vld [vmem:[#allocation4 + $0x8] sm:$0xff]
    %v130 = vld [vmem:[#allocation4 + $0x10] sm:$0xff]
    %v131 = vld [vmem:[#allocation4 + $0x18] sm:$0xff]
    %v132 = vld [vmem:[#allocation4 + $0x20] sm:$0xff]
    %v133 = vld [vmem:[#allocation4 + $0x28] sm:$0xff]
    %v134 = vld [vmem:[#allocation4 + $0x30] sm:$0xff]
    %v135 = vld [vmem:[#allocation4 + $0x38] sm:$0xff]
    %v136 = vld [vmem:[#allocation4 + $0x40] sm:$0xff]
    %v137 = vld [vmem:[#allocation4 + $0x48] sm:$0xff]
    %v138 = vld [vmem:[#allocation4 + $0x50] sm:$0xff]
    %v139 = vld [vmem:[#allocation4 + $0x58] sm:$0xff]
    %v140 = vld [vmem:[#allocation4 + $0x60] sm:$0xff]
    %v141 = vld [vmem:[#allocation4 + $0x68] sm:$0xff]
    %v142 = vld [vmem:[#allocation4 + $0x70] sm:$0xff]
    %v143 = vld [vmem:[#allocation4 + $0x78] sm:$0xff]
    %v144 = vld [vmem:[%s3 + $0x1] sm:$0x1]
    %v145 = vlaneseq
    %v146 = vshrl.u32 %v145, 7
    %v147 = vsub.s32 0, %v146
    %v148 = vrot.slane %v144, %v147
    %149 = vmatprep.subr.mxu0 0.0
    %150 = vmatpush1.msra.mxu0 %v143
    %151 = vmatprep.subr.mxu0 0.0
    %152 = vmatpush1.msra.mxu0 %v142
    %153 = vmatprep.subr.mxu0 0.0
    %154 = vmatpush1.msra.mxu0 %v141
    %155 = vmatprep.subr.mxu0 0.0
    %156 = vmatpush1.msra.mxu0 %v140
    %157 = vmatprep.subr.mxu0 0.0
    %158 = vmatpush1.msra.mxu0 %v139
    %159 = vmatprep.subr.mxu0 0.0
    %160 = vmatpush1.msra.mxu0 %v138
    %161 = vmatprep.subr.mxu0 0.0
    %162 = vmatpush1.msra.mxu0 %v137
    %163 = vmatprep.subr.mxu0 0.0
    %164 = vmatpush1.msra.mxu0 %v136
    %165 = vmatprep.subr.mxu0 0.0
    %166 = vmatpush1.msra.mxu0 %v135
    %167 = vmatprep.subr.mxu0 0.0
    %168 = vmatpush1.msra.mxu0 %v134
    %169 = vmatprep.subr.mxu0 0.0
    %170 = vmatpush1.msra.mxu0 %v133
    %171 = vmatprep.subr.mxu0 0.0
    %172 = vmatpush1.msra.mxu0 %v132
    %173 = vmatprep.subr.mxu0 0.0
    %174 = vmatpush1.msra.mxu0 %v131
    %175 = vmatprep.subr.mxu0 0.0
    %176 = vmatpush1.msra.mxu0 %v130
    %177 = vmatprep.subr.mxu0 0.0
    %178 = vmatpush1.msra.mxu0 %v129
    %179 = vmatprep.subr.mxu0 0.0
    %180 = vmatpush1.msra.mxu0 %v128
    %181 = vmatprep.subr.mxu0 0.0
    %182 = vmatpush2.msra.mxu0 0.0
    %183 = vmatprep.subr.mxu0 0.0
    %184 = vmatpush2.msra.mxu0 0.0
    %185 = vmatprep.subr.mxu0 0.0
    %186 = vmatpush2.msra.mxu0 0.0
    %187 = vmatprep.subr.mxu0 0.0
    %188 = vmatpush2.msra.mxu0 0.0
    %189 = vmatprep.subr.mxu0 0.0
    %190 = vmatpush2.msra.mxu0 0.0
    %191 = vmatprep.subr.mxu0 0.0
    %192 = vmatpush2.msra.mxu0 0.0
    %193 = vmatprep.subr.mxu0 0.0
    %194 = vmatpush2.msra.mxu0 0.0
    %195 = vmatprep.subr.mxu0 0.0
    %196 = vmatpush2.msra.mxu0 0.0
    %197 = vmatprep.subr.mxu0 0.0
    %198 = vmatpush2.msra.mxu0 0.0
    %199 = vmatprep.subr.mxu0 0.0
    %200 = vmatpush2.msra.mxu0 0.0
    %201 = vmatprep.subr.mxu0 0.0
    %202 = vmatpush2.msra.mxu0 0.0
    %203 = vmatprep.subr.mxu0 0.0
    %204 = vmatpush2.msra.mxu0 0.0
    %205 = vmatprep.subr.mxu0 0.0
    %206 = vmatpush2.msra.mxu0 0.0
    %207 = vmatprep.subr.mxu0 0.0
    %208 = vmatpush2.msra.mxu0 0.0
    %209 = vmatprep.subr.mxu0 0.0
    %210 = vmatpush2.msra.mxu0 0.0
    %211 = vmatprep.subr.mxu0 0.0
    %212 = vmatpush2.msra.mxu0 0.0
    %213 = vmatprep.mubr.f32.mxu0 0.0
    %214 = vmatmul.mubr.f32.gmra.mxu0 %v127
    %v215 = vpop.f32.mrf.mxu0
    %v216 = vadd.f32 %v148, %v215
    %v217 = vpop.f32.mrf.mxu0
    %218 = vdwg.mxu0
    %v219 = vmax.f32 %v216, 0.0
    %v220 = vld [vmem:[#allocation4 + $0x80] sm:$0xff]
    %v221 = vld [vmem:[#allocation4 + $0x88] sm:$0xff]
    %v222 = vld [vmem:[#allocation4 + $0x90] sm:$0xff]
    %v223 = vld [vmem:[#allocation4 + $0x98] sm:$0xff]
    %v224 = vld [vmem:[#allocation4 + $0xa0] sm:$0xff]
    %v225 = vld [vmem:[#allocation4 + $0xa8] sm:$0xff]
    %v226 = vld [vmem:[#allocation4 + $0xb0] sm:$0xff]
    %v227 = vld [vmem:[#allocation4 + $0xb8] sm:$0xff]
    %v228 = vld [vmem:[#allocation4 + $0xc0] sm:$0xff]
    %v229 = vld [vmem:[#allocation4 + $0xc8] sm:$0xff]
    %v230 = vld [vmem:[#allocation4 + $0xd0] sm:$0xff]
    %v231 = vld [vmem:[#allocation4 + $0xd8] sm:$0xff]
    %v232 = vld [vmem:[#allocation4 + $0xe0] sm:$0xff]
    %v233 = vld [vmem:[#allocation4 + $0xe8] sm:$0xff]
    %v234 = vld [vmem:[#allocation4 + $0xf0] sm:$0xff]
    %v235 = vld [vmem:[#allocation4 + $0xf8] sm:$0xff]
    %v236 = vld [vmem:[%s3 + $0x2] sm:$0x1]
    %v237 = vlaneseq
    %v238 = vshrl.u32 %v237, 7
    %v239 = vsub.s32 0, %v238
    %v240 = vrot.slane %v236, %v239
    %241 = vmatprep.subr.mxu0 0.0
    %242 = vmatpush1.msra.mxu0 %v235
    %243 = vmatprep.subr.mxu0 0.0
    %244 = vmatpush1.msra.mxu0 %v234
    %245 = vmatprep.subr.mxu0 0.0
    %246 = vmatpush1.msra.mxu0 %v233
    %247 = vmatprep.subr.mxu0 0.0
    %248 = vmatpush1.msra.mxu0 %v232
    %249 = vmatprep.subr.mxu0 0.0
    %250 = vmatpush1.msra.mxu0 %v231
    %251 = vmatprep.subr.mxu0 0.0
    %252 = vmatpush1.msra.mxu0 %v230
    %253 = vmatprep.subr.mxu0 0.0
    %254 = vmatpush1.msra.mxu0 %v229
    %255 = vmatprep.subr.mxu0 0.0
    %256 = vmatpush1.msra.mxu0 %v228
    %257 = vmatprep.subr.mxu0 0.0
    %258 = vmatpush1.msra.mxu0 %v227
    %259 = vmatprep.subr.mxu0 0.0
    %260 = vmatpush1.msra.mxu0 %v226
    %261 = vmatprep.subr.mxu0 0.0
    %262 = vmatpush1.msra.mxu0 %v225
    %263 = vmatprep.subr.mxu0 0.0
    %264 = vmatpush1.msra.mxu0 %v224
    %265 = vmatprep.subr.mxu0 0.0
    %266 = vmatpush1.msra.mxu0 %v223
    %267 = vmatprep.subr.mxu0 0.0
    %268 = vmatpush1.msra.mxu0 %v222
    %269 = vmatprep.subr.mxu0 0.0
    %270 = vmatpush1.msra.mxu0 %v221
    %271 = vmatprep.subr.mxu0 0.0
    %272 = vmatpush1.msra.mxu0 %v220
    %273 = vmatprep.subr.mxu0 0.0
    %274 = vmatpush2.msra.mxu0 0.0
    %275 = vmatprep.subr.mxu0 0.0
    %276 = vmatpush2.msra.mxu0 0.0
    %277 = vmatprep.subr.mxu0 0.0
    %278 = vmatpush2.msra.mxu0 0.0
    %279 = vmatprep.subr.mxu0 0.0
    %280 = vmatpush2.msra.mxu0 0.0
    %281 = vmatprep.subr.mxu0 0.0
    %282 = vmatpush2.msra.mxu0 0.0
    %283 = vmatprep.subr.mxu0 0.0
    %284 = vmatpush2.msra.mxu0 0.0
    %285 = vmatprep.subr.mxu0 0.0
    %286 = vmatpush2.msra.mxu0 0.0
    %287 = vmatprep.subr.mxu0 0.0
    %288 = vmatpush2.msra.mxu0 0.0
    %289 = vmatprep.subr.mxu0 0.0
    %290 = vmatpush2.msra.mxu0 0.0
    %291 = vmatprep.subr.mxu0 0.0
    %292 = vmatpush2.msra.mxu0 0.0
    %293 = vmatprep.subr.mxu0 0.0
    %294 = vmatpush2.msra.mxu0 0.0
    %295 = vmatprep.subr.mxu0 0.0
    %296 = vmatpush2.msra.mxu0 0.0
    %297 = vmatprep.subr.mxu0 0.0
    %298 = vmatpush2.msra.mxu0 0.0
    %299 = vmatprep.subr.mxu0 0.0
    %300 = vmatpush2.msra.mxu0 0.0
    %301 = vmatprep.subr.mxu0 0.0
    %302 = vmatpush2.msra.mxu0 0.0
    %303 = vmatprep.subr.mxu0 0.0
    %304 = vmatpush2.msra.mxu0 0.0
    %305 = vmatprep.mubr.f32.mxu0 0.0
    %306 = vmatmul.mubr.f32.gmra.mxu0 %v219
    %v307 = vpop.f32.mrf.mxu0
    %v308 = vadd.f32 %v240, %v307
    %v309 = vpop.f32.mrf.mxu0
    %310 = vdwg.mxu0
    %v311 = vmax.f32 %v308, 0.0
    %v312 = vld [vmem:[#allocation4 + $0x100] sm:$0xff]
    %v313 = vld [vmem:[#allocation4 + $0x108] sm:$0xff]
    %v314 = vld [vmem:[#allocation4 + $0x110] sm:$0xff]
    %v315 = vld [vmem:[#allocation4 + $0x118] sm:$0xff]
    %v316 = vld [vmem:[#allocation4 + $0x120] sm:$0xff]
    %v317 = vld [vmem:[#allocation4 + $0x128] sm:$0xff]
    %v318 = vld [vmem:[#allocation4 + $0x130] sm:$0xff]
    %v319 = vld [vmem:[#allocation4 + $0x138] sm:$0xff]
    %v320 = vld [vmem:[#allocation4 + $0x140] sm:$0xff]
    %v321 = vld [vmem:[#allocation4 + $0x148] sm:$0xff]
    %v322 = vld [vmem:[#allocation4 + $0x150] sm:$0xff]
    %v323 = vld [vmem:[#allocation4 + $0x158] sm:$0xff]
    %v324 = vld [vmem:[#allocation4 + $0x160] sm:$0xff]
    %v325 = vld [vmem:[#allocation4 + $0x168] sm:$0xff]
    %v326 = vld [vmem:[#allocation4 + $0x170] sm:$0xff]
    %v327 = vld [vmem:[#allocation4 + $0x178] sm:$0xff]
    %v328 = vld [vmem:[%s3 + $0x3] sm:$0x1]
    %v329 = vlaneseq
    %v330 = vshrl.u32 %v329, 7
    %v331 = vsub.s32 0, %v330
    %v332 = vrot.slane %v328, %v331
    %333 = vmatprep.subr.mxu0 0.0
    %334 = vmatpush1.msra.mxu0 %v327
    %335 = vmatprep.subr.mxu0 0.0
    %336 = vmatpush1.msra.mxu0 %v326
    %337 = vmatprep.subr.mxu0 0.0
    %338 = vmatpush1.msra.mxu0 %v325
    %339 = vmatprep.subr.mxu0 0.0
    %340 = vmatpush1.msra.mxu0 %v324
    %341 = vmatprep.subr.mxu0 0.0
    %342 = vmatpush1.msra.mxu0 %v323
    %343 = vmatprep.subr.mxu0 0.0
    %344 = vmatpush1.msra.mxu0 %v322
    %345 = vmatprep.subr.mxu0 0.0
    %346 = vmatpush1.msra.mxu0 %v321
    %347 = vmatprep.subr.mxu0 0.0
    %348 = vmatpush1.msra.mxu0 %v320
    %349 = vmatprep.subr.mxu0 0.0
    %350 = vmatpush1.msra.mxu0 %v319
    %351 = vmatprep.subr.mxu0 0.0
    %352 = vmatpush1.msra.mxu0 %v318
    %353 = vmatprep.subr.mxu0 0.0
    %354 = vmatpush1.msra.mxu0 %v317
    %355 = vmatprep.subr.mxu0 0.0
    %356 = vmatpush1.msra.mxu0 %v316
    %357 = vmatprep.subr.mxu0 0.0
    %358 = vmatpush1.msra.mxu0 %v315
    %359 = vmatprep.subr.mxu0 0.0
    %360 = vmatpush1.msra.mxu0 %v314
    %361 = vmatprep.subr.mxu0 0.0
    %362 = vmatpush1.msra.mxu0 %v313
    %363 = vmatprep.subr.mxu0 0.0
    %364 = vmatpush1.msra.mxu0 %v312
    %365 = vmatprep.subr.mxu0 0.0
    %366 = vmatpush2.msra.mxu0 0.0
    %367 = vmatprep.subr.mxu0 0.0
    %368 = vmatpush2.msra.mxu0 0.0
    %369 = vmatprep.subr.mxu0 0.0
    %370 = vmatpush2.msra.mxu0 0.0
    %371 = vmatprep.subr.mxu0 0.0
    %372 = vmatpush2.msra.mxu0 0.0
    %373 = vmatprep.subr.mxu0 0.0
    %374 = vmatpush2.msra.mxu0 0.0
    %375 = vmatprep.subr.mxu0 0.0
    %376 = vmatpush2.msra.mxu0 0.0
    %377 = vmatprep.subr.mxu0 0.0
    %378 = vmatpush2.msra.mxu0 0.0
    %379 = vmatprep.subr.mxu0 0.0
    %380 = vmatpush2.msra.mxu0 0.0
    %381 = vmatprep.subr.mxu0 0.0
    %382 = vmatpush2.msra.mxu0 0.0
    %383 = vmatprep.subr.mxu0 0.0
    %384 = vmatpush2.msra.mxu0 0.0
    %385 = vmatprep.subr.mxu0 0.0
    %386 = vmatpush2.msra.mxu0 0.0
    %387 = vmatprep.subr.mxu0 0.0
    %388 = vmatpush2.msra.mxu0 0.0
    %389 = vmatprep.subr.mxu0 0.0
    %390 = vmatpush2.msra.mxu0 0.0
    %391 = vmatprep.subr.mxu0 0.0
    %392 = vmatpush2.msra.mxu0 0.0
    %393 = vmatprep.subr.mxu0 0.0
    %394 = vmatpush2.msra.mxu0 0.0
    %395 = vmatprep.subr.mxu0 0.0
    %396 = vmatpush2.msra.mxu0 0.0
    %397 = vmatprep.mubr.f32.mxu0 0.0
    %398 = vmatmul.mubr.f32.gmra.mxu0 %v311
    %v399 = vpop.f32.mrf.mxu0
    %v400 = vadd.f32 %v332, %v399
    %v401 = vpop.f32.mrf.mxu0
    %402 = vdwg.mxu0
    %v403 = vmax.f32 %v400, 0.0
    %v404 = vld [vmem:[#allocation4 + $0x180] sm:$0xff]
    %v405 = vld [vmem:[#allocation4 + $0x188] sm:$0xff]
    %v406 = vld [vmem:[#allocation4 + $0x190] sm:$0xff]
    %v407 = vld [vmem:[#allocation4 + $0x198] sm:$0xff]
    %v408 = vld [vmem:[#allocation4 + $0x1a0] sm:$0xff]
    %v409 = vld [vmem:[#allocation4 + $0x1a8] sm:$0xff]
    %v410 = vld [vmem:[#allocation4 + $0x1b0] sm:$0xff]
    %v411 = vld [vmem:[#allocation4 + $0x1b8] sm:$0xff]
    %v412 = vld [vmem:[#allocation4 + $0x1c0] sm:$0xff]
    %v413 = vld [vmem:[#allocation4 + $0x1c8] sm:$0xff]
    %v414 = vld [vmem:[#allocation4 + $0x1d0] sm:$0xff]
    %v415 = vld [vmem:[#allocation4 + $0x1d8] sm:$0xff]
    %v416 = vld [vmem:[#allocation4 + $0x1e0] sm:$0xff]
    %v417 = vld [vmem:[#allocation4 + $0x1e8] sm:$0xff]
    %v418 = vld [vmem:[#allocation4 + $0x1f0] sm:$0xff]
    %v419 = vld [vmem:[#allocation4 + $0x1f8] sm:$0xff]
    %v420 = vld [vmem:[%s3 + $0x4] sm:$0x1]
    %v421 = vlaneseq
    %v422 = vshrl.u32 %v421, 7
    %v423 = vsub.s32 0, %v422
    %v424 = vrot.slane %v420, %v423
    %425 = vmatprep.subr.mxu0 0.0
    %426 = vmatpush1.msra.mxu0 %v419
    %427 = vmatprep.subr.mxu0 0.0
    %428 = vmatpush1.msra.mxu0 %v418
    %429 = vmatprep.subr.mxu0 0.0
    %430 = vmatpush1.msra.mxu0 %v417
    %431 = vmatprep.subr.mxu0 0.0
    %432 = vmatpush1.msra.mxu0 %v416
    %433 = vmatprep.subr.mxu0 0.0
    %434 = vmatpush1.msra.mxu0 %v415
    %435 = vmatprep.subr.mxu0 0.0
    %436 = vmatpush1.msra.mxu0 %v414
    %437 = vmatprep.subr.mxu0 0.0
    %438 = vmatpush1.msra.mxu0 %v413
    %439 = vmatprep.subr.mxu0 0.0
    %440 = vmatpush1.msra.mxu0 %v412
    %441 = vmatprep.subr.mxu0 0.0
    %442 = vmatpush1.msra.mxu0 %v411
    %443 = vmatprep.subr.mxu0 0.0
    %444 = vmatpush1.msra.mxu0 %v410
    %445 = vmatprep.subr.mxu0 0.0
    %446 = vmatpush1.msra.mxu0 %v409
    %447 = vmatprep.subr.mxu0 0.0
    %448 = vmatpush1.msra.mxu0 %v408
    %449 = vmatprep.subr.mxu0 0.0
    %450 = vmatpush1.msra.mxu0 %v407
    %451 = vmatprep.subr.mxu0 0.0
    %452 = vmatpush1.msra.mxu0 %v406
    %453 = vmatprep.subr.mxu0 0.0
    %454 = vmatpush1.msra.mxu0 %v405
    %455 = vmatprep.subr.mxu0 0.0
    %456 = vmatpush1.msra.mxu0 %v404
    %457 = vmatprep.subr.mxu0 0.0
    %458 = vmatpush2.msra.mxu0 0.0
    %459 = vmatprep.subr.mxu0 0.0
    %460 = vmatpush2.msra.mxu0 0.0
    %461 = vmatprep.subr.mxu0 0.0
    %462 = vmatpush2.msra.mxu0 0.0
    %463 = vmatprep.subr.mxu0 0.0
    %464 = vmatpush2.msra.mxu0 0.0
    %465 = vmatprep.subr.mxu0 0.0
    %466 = vmatpush2.msra.mxu0 0.0
    %467 = vmatprep.subr.mxu0 0.0
    %468 = vmatpush2.msra.mxu0 0.0
    %469 = vmatprep.subr.mxu0 0.0
    %470 = vmatpush2.msra.mxu0 0.0
    %471 = vmatprep.subr.mxu0 0.0
    %472 = vmatpush2.msra.mxu0 0.0
    %473 = vmatprep.subr.mxu0 0.0
    %474 = vmatpush2.msra.mxu0 0.0
    %475 = vmatprep.subr.mxu0 0.0
    %476 = vmatpush2.msra.mxu0 0.0
    %477 = vmatprep.subr.mxu0 0.0
    %478 = vmatpush2.msra.mxu0 0.0
    %479 = vmatprep.subr.mxu0 0.0
    %480 = vmatpush2.msra.mxu0 0.0
    %481 = vmatprep.subr.mxu0 0.0
    %482 = vmatpush2.msra.mxu0 0.0
    %483 = vmatprep.subr.mxu0 0.0
    %484 = vmatpush2.msra.mxu0 0.0
    %485 = vmatprep.subr.mxu0 0.0
    %486 = vmatpush2.msra.mxu0 0.0
    %487 = vmatprep.subr.mxu0 0.0
    %488 = vmatpush2.msra.mxu0 0.0
    %489 = vmatprep.mubr.f32.mxu0 0.0
    %490 = vmatmul.mubr.f32.gmra.mxu0 %v403
    %v491 = vpop.f32.mrf.mxu0
    %v492 = vadd.f32 %v424, %v491
    %v493 = vpop.f32.mrf.mxu0
    %494 = vdwg.mxu0
    %v495 = vld [vmem:[%s3 + $0x5] sm:$0x1]
    %v496 = vld [vmem:[%s3 + $0x6] sm:$0x1]
    %v497 = vlaneseq
    %v498 = vshrl.u32 %v497, 7
    %v499 = vsub.s32 0, %v498
    %v500 = vrot.slane %v495, %v499
    %v501 = vmax.f32 %v500, %v492
    %v502 = vlaneseq
    %v503 = vshrl.u32 %v502, 7
    %v504 = vsub.s32 0, %v503
    %v505 = vrot.slane %v496, %v504
    %v506 = vmin.f32 %v505, %v501
    %507 = vst [vmem:[%s4] sm:$0xff] %v506
    // Predicated region
    $region26: #{hybrid_actor_critic_forward.1} parent=1 // pred_check
      _
    $region27: #{hybrid_actor_critic_forward.1} parent=1 // pred_check_branch
      %509 = sbr.rel (0) target = $region29
    $region28: #{hybrid_actor_critic_forward.1} parent=1 // pred_region
      _
    $region29: #{hybrid_actor_critic_forward.1} parent=1 // pred_fallthru
      _
    // Predicated region
    $region30: #{hybrid_actor_critic_forward.1} parent=1 // pred_check
      _
    $region31: #{hybrid_actor_critic_forward.1} parent=1 // pred_check_branch
      %511 = sbr.rel (0) target = $region33
    $region32: #{hybrid_actor_critic_forward.1} parent=1 // pred_region
      _
    $region33: #{hybrid_actor_critic_forward.1} parent=1 // pred_fallthru
      _
    %512 = vsyncpa [#allocation3], 1
    %513 = vsyncpa [#allocation5], 1

</llo_original>
